<compile_context>
chip_gen: v6e
topology: v6e:2x2x1
jax: 0.10.0
libtpu: 0.0.40
codegen_flags: <defaults>
</compile_context>

<pallas_src>
import functools

import jax
import jax.numpy as jnp
from jax.experimental import pallas as pl
from jax.experimental.pallas import tpu as pltpu

# ---- AdaptCLIP preprocessing constants ----
FACTOR = 1.0 / (1.0 - 0.0)                 # tensor_range = [0.0, 1.0]
BIAS = 0.0 - 0.0 * FACTOR
CLIP_MEAN = (0.48145466, 0.4578275, 0.40821073)
CLIP_STD = (0.26862954, 0.26130258, 0.27577711)
COS_EPS = 1e-8                             # torch.cosine_similarity default eps
NORM_EPS = 1e-12                           # clamp under the feature-norm rsqrt

_VMEM = pl.BlockSpec(memory_space=pltpu.MemorySpace.VMEM)


def _round_up(x, m):
    return (x + m - 1) // m * m


# ----------------------------- Pallas kernels ------------------------------

def _pool_kernel(x_ref, o_ref, *, ps, nh, nw):
    """Spatial patch-position mean of raw NCHW images.

    x_ref: (T, C, H, W) f32 raw image block
    o_ref: (T, C, ps, ps) pooled patch mean (== token mean of the patch matrix,
           valid because the stand-in encoder is linear up to pooling).
    """
    inv_n = 1.0 / float(nh * nw)
    acc = x_ref[:, :, 0:ps, 0:ps].astype(jnp.float32)
    # Static unrolled sum over the nh*nw non-overlapping windows (ref slices ->
    # windowed VMEM loads; nh*nw stays small: 4 here, 49 at 224x224 / ps=32).
    for i in range(nh):
        for j in range(nw):
            if i == 0 and j == 0:
                continue
            acc = acc + x_ref[:, :, i * ps:(i + 1) * ps, j * ps:(j + 1) * ps]
    o_ref[...] = (acc * inv_n).astype(o_ref.dtype)


def _encode_loss_kernel(xp_ref, w_ref, b_ref, o_ref, *, batch, group_rows):
    """Folded-encoder matmul over ALL pooled rows + CLIPLossDir loss, fused.

    xp_ref: (4*G, P_pad) pooled patch means; groups [x1; x2; ref1; ref2], each
            padded to G rows (rows >= batch in a group are zero padding).
    w_ref:  (P_pad, E_pad) folded (preproc + patch-embed + proj) weights.
    b_ref:  (1, E_pad) folded bias.    o_ref: (1, 1) loss.
    Padded feature columns are exactly zero (zero weight/bias columns), so all
    norms / dots over E_pad equal the unpadded values.
    """
    G = group_rows
    # Single large-M MXU push over all 4G rows; f32 accumulation.
    feats = jnp.dot(xp_ref[...], w_ref[...],
                    preferred_element_type=jnp.float32) + b_ref[...]

    f1 = feats[0 * G:1 * G]                                         # (G, E_pad)
    f2 = feats[1 * G:2 * G]
    r1 = feats[2 * G:3 * G]
    r2 = feats[3 * G:4 * G]

    # row-validity mask: rows >= batch within each group are padding
    row = jax.lax.broadcasted_iota(jnp.int32, (G, 1), 0)
    valid = (row < batch).astype(jnp.float32)                       # (G, 1)
    inv_b = 1.0 / float(batch)

    def l2norm(v):
        ss = jnp.sum(v * v, axis=-1, keepdims=True)
        return v * jax.lax.rsqrt(jnp.maximum(ss, NORM_EPS * NORM_EPS))

    # reference features: batch-mean then L2 normalize (reduce_batch=True)
    ref1 = l2norm(jnp.sum(r1 * valid, axis=0, keepdims=True) * inv_b)   # (1, E)
    ref2 = l2norm(jnp.sum(r2 * valid, axis=0, keepdims=True) * inv_b)
    # input features: per-row L2 normalize (reduce_batch=False)
    f1 = l2norm(f1)
    f2 = l2norm(f2)

    d1 = f1 - ref1
    d2 = f2 - ref2
    num = jnp.sum(d1 * d2, axis=-1, keepdims=True)                  # (G, 1)
    n1sq = jnp.sum(d1 * d1, axis=-1, keepdims=True)
    n2sq = jnp.sum(d2 * d2, axis=-1, keepdims=True)
    # cos = num / max(||d1||*||d2||, eps) via an EUP rsqrt instead of divide
    cos = num * jax.lax.rsqrt(jnp.maximum(n1sq * n2sq, COS_EPS * COS_EPS))

    mean_cos = jnp.sum(cos * valid, axis=0, keepdims=True) * inv_b  # (1, 1)
    o_ref[...] = 1.0 - mean_cos


# ------------------------------ JAX wrappers --------------------------------

def _preprocess_vectors(ps):
    scale_c = jnp.asarray([FACTOR / s for s in CLIP_STD], jnp.float32)
    shift_c = jnp.asarray([(BIAS - m) / s for m, s in zip(CLIP_MEAN, CLIP_STD)],
                          jnp.float32)
    scale = jnp.repeat(scale_c, ps * ps)                             # (P,)
    shift = jnp.repeat(shift_c, ps * ps)                             # (P,)
    return scale, shift


def _fold_params(params, ps, mxu_dtype):
    """Fold preprocessing + patch-embed + projection into one (P_pad, E_pad) matrix."""
    wpatch, bpatch, wproj = params
    P, _ = wpatch.shape
    E = wproj.shape[1]
    scale, shift = _preprocess_vectors(ps)

    w1 = scale[:, None] * wpatch                                     # (P, D)
    b1 = bpatch + shift[None, :] @ wpatch                            # (1, D)
    wf = (w1 @ wproj).astype(jnp.float32)                            # (P, E)
    bf = (b1 @ wproj).astype(jnp.float32)                            # (1, E)

    # Zero-pad P (LHS lane / contraction dim) and E (feature lane dim) to
    # multiples of 128 so loads/stores in the encode kernel are unmasked.
    p_pad = _round_up(P, 128)
    e_pad = _round_up(E, 128)
    wf = jnp.pad(wf, ((0, p_pad - P), (0, e_pad - E))).astype(mxu_dtype)
    bf = jnp.pad(bf, ((0, 0), (0, e_pad - E)))
    return wf, bf


def pool_images_pallas(x_all, ps, *, img_tile=8, out_dtype=jnp.float32):
    """Per-patch-position spatial mean of all stacked images (one gridded call).

    x_all: [M, C, H, W] f32 (M = 4*G: x1, x2, ref1, ref2 groups of G rows).
    Returns [M, C, ps, ps] pooled patch means in `out_dtype`.
    """
    M, C, H, W = x_all.shape
    nh, nw = H // ps, W // ps
    assert H == nh * ps and W == nw * ps, "H and W must be multiples of ps"
    assert M % 8 == 0, "image count must be sublane-aligned (groups padded to 8)"

    img_tile = min(img_tile, M)
    if img_tile % 8 != 0 or M % img_tile != 0:
        img_tile = 8
    grid = (M // img_tile,)

    return pl.pallas_call(
        functools.partial(_pool_kernel, ps=ps, nh=nh, nw=nw),
        out_shape=jax.ShapeDtypeStruct((M, C, ps, ps), out_dtype),
        grid_spec=pltpu.PrefetchScalarGridSpec(
            num_scalar_prefetch=0,
            grid=grid,
            in_specs=[pl.BlockSpec((img_tile, C, H, W),
                                   lambda i: (i, 0, 0, 0))],
            out_specs=pl.BlockSpec((img_tile, C, ps, ps),
                                   lambda i: (i, 0, 0, 0)),
        ),
        # "parallel" only matters on v7x (2 TCs); harmless no-op on v5e/v6e.
        compiler_params=pltpu.CompilerParams(
            dimension_semantics=("parallel",)),
    )(x_all)


def encode_and_loss_pallas(pooled, wf, bf, *, batch, group_rows):
    """One fused pallas_call: all-rows folded-encoder matmul + CLIPLossDir loss."""
    out = pl.pallas_call(
        functools.partial(_encode_loss_kernel, batch=batch,
                          group_rows=group_rows),
        out_shape=jax.ShapeDtypeStruct((1, 1), jnp.float32),
        in_specs=[_VMEM, _VMEM, _VMEM],
        out_specs=_VMEM,
    )(pooled, wf, bf)
    return out[0, 0]


def clip_loss_dir_forward(x1, x2, ref1, ref2, params, ps, *,
                          img_tile=8, mxu_dtype=jnp.bfloat16):
    """Full CLIPLossDir forward: pool kernel + fused encode/loss kernel.

    mxu_dtype: bfloat16 (default) runs the MXU at full rate on v6e/v7x and
    halves operand DMA / VMEM; pass jnp.float32 for bit-tighter numerics.
    """
    B, C, H, W = x1.shape
    G = _round_up(B, 8)          # group stride: sublane-aligned, handles any B

    def pad_group(x):
        return jnp.pad(x.astype(jnp.float32),
                       ((0, G - B), (0, 0), (0, 0), (0, 0)))

    # Stack [x1; x2; ref1; ref2], each zero-padded to G rows so every feature
    # group starts at a multiple of 8 rows (at most 4*7 wasted zero images).
    x_all = jnp.concatenate(
        [pad_group(x1), pad_group(x2), pad_group(ref1), pad_group(ref2)],
        axis=0)                                                      # (4G, C, H, W)

    wf, bf = _fold_params(params, ps, mxu_dtype)       # (P_pad, E_pad), (1, E_pad)
    P = C * ps * ps
    P_pad = wf.shape[0]

    pooled = pool_images_pallas(x_all, ps, img_tile=img_tile,
                                out_dtype=mxu_dtype)                 # (4G, C, ps, ps)
    pooled = pooled.reshape(4 * G, P)          # contiguous merge: free in HBM
    if P_pad != P:
        pooled = jnp.pad(pooled, ((0, 0), (0, P_pad - P)))           # lane-pad K

    return encode_and_loss_pallas(pooled, wf, bf, batch=B, group_rows=G)


# ------------------------------- reference ----------------------------------

def _reference_loss(x1, x2, ref1, ref2, params, ps):
    """Pure-JAX f32 reference (unfolded preprocessing, pool-after-matmul)."""
    wpatch, bpatch, wproj = params
    scale, shift = _preprocess_vectors(ps)
    scale, shift = scale[None, :], shift[None, :]

    def enc(x):
        B, C, H, W = x.shape
        nh, nw = H // ps, W // ps
        xp = x.reshape(B, C, nh, ps, nw, ps).transpose(0, 2, 4, 1, 3, 5)
        xp = xp.reshape(B * nh * nw, C * ps * ps).astype(jnp.float32)
        tok = (xp * scale + shift) @ wpatch + bpatch
        pooled = tok.reshape(B, nh * nw, -1).mean(axis=1)
        return pooled @ wproj

    def l2(v):
        return v / jnp.linalg.norm(v, axis=-1, keepdims=True)

    f1, f2 = l2(enc(x1)), l2(enc(x2))
    r1 = l2(enc(ref1).mean(axis=0, keepdims=True))
    r2 = l2(enc(ref2).mean(axis=0, keepdims=True))
    d1, d2 = f1 - r1, f2 - r2
    cos = jnp.sum(d1 * d2, -1) / jnp.maximum(
        jnp.linalg.norm(d1, axis=-1) * jnp.linalg.norm(d2, axis=-1), COS_EPS)
    return 1.0 - jnp.mean(cos)


# --------------------------------- main --------------------------------------

if __name__ == "__main__":
    B, C, H, W = 4, 3, 16, 16          # small synthetic NCHW images
    ps, D, E = 8, 32, 32               # patch size, embed dim, feature dim
    P = C * ps * ps

    key = jax.random.PRNGKey(0)
    ks = jax.random.split(key, 6)
    x1 = jax.random.uniform(ks[0], (B, C, H, W), jnp.float32)
    x2 = jax.random.uniform(ks[1], (B, C, H, W), jnp.float32)
    ref1 = jax.random.uniform(ks[2], (B, C, H, W), jnp.float32)
    ref2 = jax.random.uniform(ks[3], (B, C, H, W), jnp.float32)

    # deterministic synthetic encoder parameters
    wpatch = 0.02 * jax.random.normal(ks[4], (P, D), jnp.float32)
    bpatch = jnp.zeros((1, D), jnp.float32)
    wproj = 0.02 * jax.random.normal(ks[5], (D, E), jnp.float32)
    params = (wpatch, bpatch, wproj)

    ref_loss = jax.block_until_ready(
        _reference_loss(x1, x2, ref1, ref2, params, ps))

    # f32 MXU path: strict check against the pure-JAX f32 reference.
    loss_f32 = jax.block_until_ready(
        clip_loss_dir_forward(x1, x2, ref1, ref2, params, ps,
                              img_tile=8, mxu_dtype=jnp.float32))
    assert loss_f32.shape == (), f"expected scalar loss, got {loss_f32.shape}"
    assert bool(jnp.isfinite(loss_f32)), "f32 loss is not finite"
    assert abs(float(loss_f32) - float(ref_loss)) < 1e-3, \
        (float(loss_f32), float(ref_loss))

    # bf16 MXU path (recommended default on v6e/v7x): loose tolerance because
    # bf16 rounding through cosine-of-small-delta vectors amplifies rel. error.
    loss_bf16 = jax.block_until_ready(
        clip_loss_dir_forward(x1, x2, ref1, ref2, params, ps,
                              img_tile=8, mxu_dtype=jnp.bfloat16))
    assert bool(jnp.isfinite(loss_bf16)), "bf16 loss is not finite"
    assert abs(float(loss_bf16) - float(ref_loss)) < 2e-1, \
        (float(loss_bf16), float(ref_loss))

    print("KERNEL_OK")
</pallas_src>

<mosaic_0001>
module attributes {stable_mosaic.version = 11 : i64} {
  func.func @_pool_kernel(%arg0: i32, %arg1: memref<8x3x16x16xf32, #tpu.memory_space<vmem>>, %arg2: memref<8x3x8x8xf32, #tpu.memory_space<vmem>>) attributes {dimension_semantics = [#tpu.dimension_semantics<parallel>], iteration_bounds = array<i64: 4>, scalar_prefetch = 0 : i64, scratch_operands = 0 : i64, tpu.core_type = #tpu.core_type<tc>, window_params = [{transform_indices = @transform_0, window_bounds = array<i64: 8, 3, 16, 16>}, {transform_indices = @transform_1, window_bounds = array<i64: 8, 3, 8, 8>}]} {
    %c0 = arith.constant 0 : index
    %c0_0 = arith.constant 0 : index
    %c0_1 = arith.constant 0 : index
    %c0_2 = arith.constant 0 : index
    %0 = vector.load %arg1[%c0, %c0_0, %c0_1, %c0_2] : memref<8x3x16x16xf32, #tpu.memory_space<vmem>>, vector<8x3x8x8xf32>
    %c0_3 = arith.constant 0 : index
    %c0_4 = arith.constant 0 : index
    %c0_5 = arith.constant 0 : index
    %c8 = arith.constant 8 : index
    %1 = vector.load %arg1[%c0_3, %c0_4, %c0_5, %c8] : memref<8x3x16x16xf32, #tpu.memory_space<vmem>>, vector<8x3x8x8xf32>
    %2 = arith.addf %0, %1 : vector<8x3x8x8xf32>
    %c0_6 = arith.constant 0 : index
    %c0_7 = arith.constant 0 : index
    %c8_8 = arith.constant 8 : index
    %c0_9 = arith.constant 0 : index
    %3 = vector.load %arg1[%c0_6, %c0_7, %c8_8, %c0_9] : memref<8x3x16x16xf32, #tpu.memory_space<vmem>>, vector<8x3x8x8xf32>
    %4 = arith.addf %2, %3 : vector<8x3x8x8xf32>
    %c0_10 = arith.constant 0 : index
    %c0_11 = arith.constant 0 : index
    %c8_12 = arith.constant 8 : index
    %c8_13 = arith.constant 8 : index
    %5 = vector.load %arg1[%c0_10, %c0_11, %c8_12, %c8_13] : memref<8x3x16x16xf32, #tpu.memory_space<vmem>>, vector<8x3x8x8xf32>
    %6 = arith.addf %4, %5 : vector<8x3x8x8xf32>
    %cst = arith.constant 2.500000e-01 : f32
    %7 = vector.broadcast %cst : f32 to vector<8x3x8x8xf32>
    %8 = arith.mulf %6, %7 : vector<8x3x8x8xf32>
    %c0_14 = arith.constant 0 : index
    %c0_15 = arith.constant 0 : index
    %c0_16 = arith.constant 0 : index
    %c0_17 = arith.constant 0 : index
    %9 = vector.load %arg2[%c0_14, %c0_15, %c0_16, %c0_17] : memref<8x3x8x8xf32, #tpu.memory_space<vmem>>, vector<8x3x8x8xf32>
    tpu.vector_store %arg2[%c0_14, %c0_15, %c0_16, %c0_17], %8 {strides = array<i32>} : memref<8x3x8x8xf32, #tpu.memory_space<vmem>>, vector<8x3x8x8xf32>,
    return
  }
  func.func @transform_0(%arg0: i32) -> (i32, i32, i32, i32) {
    %c0_i32 = arith.constant 0 : i32
    %c0_i32_0 = arith.constant 0 : i32
    %c0_i32_1 = arith.constant 0 : i32
    %c0_i32_2 = arith.constant 0 : i32
    return %arg0, %c0_i32, %c0_i32_0, %c0_i32_1 : i32, i32, i32, i32
  }
  func.func @transform_1(%arg0: i32) -> (i32, i32, i32, i32) {
    %c0_i32 = arith.constant 0 : i32
    %c0_i32_0 = arith.constant 0 : i32
    %c0_i32_1 = arith.constant 0 : i32
    %c0_i32_2 = arith.constant 0 : i32
    return %arg0, %c0_i32, %c0_i32_0, %c0_i32_1 : i32, i32, i32, i32
  }
}

</mosaic_0001>

<llo_original>
// kernel: tpu_custom_call.1
$region0: #{tpu_custom_call.1}
  #allocation0 [shape = 'u32[]', space=smem, size = 0x4, offset = 0x4, fixed_abs, tag = 'smem constant byte address 0x4 - core index']
  #allocation1 [shape = 'u32[144,128]{1,0:T(1,128)}', space=vmem, size = 0x12000, scoped, tag = 'internal scratch']
  %s0 = inlined_call_operand.vmem [shape: f32[32,3,16,16], index: 0, kind: input, shape index: {}]
  %s1 = inlined_call_operand.vmem [shape: f32[32,3,8,8], index: 1, kind: output, shape index: {}]
  %s2 = sld [smem:[#allocation0]]
  $region37: #{tpu_custom_call.1} parent=0
    _
  %s4 = ssub.s32 1, %s2
  %s5 = scalar_select 0, %s4, %s2
  loop: start=0, step=1, limit=6
  $region2: #{tpu_custom_call.1} parent=0 // loop_pre_header
    _
  $region3: #{tpu_custom_call.1} parent=0 // loop_header
    %s7 = sphi 0, %s11
    %p8 = scmp.ge.s32.totalorder %s7, 6
    %s17 = sphi 0, %s19
    %s20 = sphi 0, %s17
    %s21 = sphi 0, %s20
    %s37 = sphi 0, %s21
    %s43 = sphi 0, %s45
    %s46 = sphi 0, %s43
    %s47 = sphi 0, %s46
    %s63 = sphi 0, %s47
  $region4: #{tpu_custom_call.1} parent=0 // loop_header_branch
    %10 = sbr.rel (%p8) target = $region8
  $region5: #{tpu_custom_call.1} parent=0 // loop_body
    %s12 = ssub.s32 %s7, 1
    %s13 = ssub.s32 %s7, 2
    %s14 = sadd.s32 %s7, 1
    %s15 = ssub.s32 %s7, %s14
    %p16 = scmp.eq.s32.totalorder %s15, 0
    %s18 = sadd.s32 %s17, 1
    %s19 = scalar_select %p16, %s17, %s18
    %p22 = pneg %p16
    %p23 = scmp.eq.s32.totalorder %s7, 3
    %p24 = por %p22, %p23
    %p25 = scmp.ne.s32.totalorder %s17, %s20
    %p26 = scmp.eq.s32.totalorder %s7, 0
    %p27 = por %p25, %p26
    %p28 = scmp.ne.s32.totalorder %s17, %s20
    %p29 = scmp.eq.s32.totalorder %s12, 3
    %p30 = por %p28, %p29
    %p31 = scmp.ne.s32.totalorder %s20, %s21
    %p32 = scmp.eq.s32.totalorder %s12, 0
    %p33 = por %p31, %p32
    %p34 = scmp.ne.s32.totalorder %s20, %s21
    %p35 = scmp.eq.s32.totalorder %s13, 3
    %p36 = por %p34, %p35
    %p38 = scmp.ne.s32.totalorder %s21, %s37
    %p39 = scmp.eq.s32.totalorder %s13, 0
    %p40 = por %p38, %p39
    %s41 = ssub.s32 %s7, %s14
    %p42 = scmp.eq.s32.totalorder %s41, 0
    %s44 = sadd.s32 %s43, 1
    %s45 = scalar_select %p42, %s43, %s44
    %p48 = pneg %p42
    %p49 = scmp.eq.s32.totalorder %s7, 3
    %p50 = por %p48, %p49
    %p51 = scmp.ne.s32.totalorder %s43, %s46
    %p52 = scmp.eq.s32.totalorder %s7, 0
    %p53 = por %p51, %p52
    %p54 = scmp.ne.s32.totalorder %s43, %s46
    %p55 = scmp.eq.s32.totalorder %s12, 3
    %p56 = por %p54, %p55
    %p57 = scmp.ne.s32.totalorder %s46, %s47
    %p58 = scmp.eq.s32.totalorder %s12, 0
    %p59 = por %p57, %p58
    %p60 = scmp.ne.s32.totalorder %s46, %s47
    %p61 = scmp.eq.s32.totalorder %s13, 3
    %p62 = por %p60, %p61
    %p64 = scmp.ne.s32.totalorder %s47, %s63
    %p65 = scmp.eq.s32.totalorder %s13, 0
    %p66 = por %p64, %p65
    %p67 = scmp.le.s32.totalorder 1, %s7
    %p68 = scmp.lt.s32.totalorder %s7, 5
    %p69 = pnand %p67, %p68
    %p70 = pneg %p69
    // Predicated region
    $region9: #{tpu_custom_call.1} parent=5 // pred_check
      _
    $region10: #{tpu_custom_call.1} parent=5 // pred_check_branch
      %72 = sbr.rel (%p69) target = $region12
    $region11: #{tpu_custom_call.1} parent=5 // pred_region
      %s73 = ssub.s32 %s7, 1
    $region12: #{tpu_custom_call.1} parent=5 // pred_fallthru
      _
    %p74 = scmp.lt.s32.totalorder %s7, 4
    // Predicated region
    $region13: #{tpu_custom_call.1} parent=5 // pred_check
      %p75 = pneg %p74
    $region14: #{tpu_custom_call.1} parent=5 // pred_check_branch
      %77 = sbr.rel (%p75) target = $region16
    $region15: #{tpu_custom_call.1} parent=5 // pred_region
      // Predicated region
      $region17: #{tpu_custom_call.1} parent=15 // pred_check
        %p78 = pneg %p27
      $region18: #{tpu_custom_call.1} parent=15 // pred_check_branch
        %80 = sbr.rel (%p78) target = $region20
      $region19: #{tpu_custom_call.1} parent=15 // pred_region
        %s81 = smul.u32 8, %s7
        %p82 = scmp.lt.s32.totalorder %s81, 31
        %s83 = scalar_select %p82, %s81, 31
        %s84 = smul.addr %s83, 6
        %s85 = smul.addr %s84, 8
        %s86 = scalar_lea.vmem %s0, %s85
        %s87 = smul.u32 8, %s7
      $region20: #{tpu_custom_call.1} parent=15 // pred_fallthru
        _
    $region16: #{tpu_custom_call.1} parent=5 // pred_fallthru
      _
    %p88 = scmp.le.s32.totalorder 1, %s7
    %p89 = scmp.lt.s32.totalorder %s7, 5
    %p90 = pnand %p88, %p89
    %p91 = pneg %p90
    // Predicated region
    $region21: #{tpu_custom_call.1} parent=5 // pred_check
      _
    $region22: #{tpu_custom_call.1} parent=5 // pred_check_branch
      %93 = sbr.rel (%p90) target = $region24
    $region23: #{tpu_custom_call.1} parent=5 // pred_region
      %s94 = ssub.s32 %s7, 1
      %s95 = smul.u32 8, %s12
      %p96 = scmp.lt.s32.totalorder %s95, 31
      %s97 = scalar_select %p96, %s95, 31
      %s98 = smul.addr %s97, 6
      %s99 = smul.addr %s98, 8
      %s100 = scalar_lea.vmem %s0, %s99
      %p101 = pneg %p33
      %p102 = pneg %p30
      %p103 = pneg %p59
      %p104 = pneg %p56
      %s105 = smul.u32 8, %s12
      %p106 = scmp.lt.s32.totalorder %s105, 31
      %s107 = scalar_select %p106, %s105, 31
      %s108 = smul.addr %s107, 3
      %s109 = smul.addr %s108, 8
      %s110 = scalar_lea.vmem %s1, %s109
      %s111 = smul.u32 8, %s12
      %p112 = scmp.lt.s32.totalorder %s111, 31
      %s113 = scalar_select %p112, %s111, 31
      %s114 = smul.addr %s113, 6
      %s115 = smul.addr %s114, 8
      %s116 = scalar_lea.vmem %s0, %s115
      %s117 = smul.u32 8, %s12
      %s118 = smul.u32 8, %s12
      %p119 = scmp.lt.s32.totalorder %s118, 31
      %s120 = scalar_select %p119, %s118, 31
      %s121 = smul.addr %s120, 3
      %s122 = smul.addr %s121, 8
      %s123 = scalar_lea.vmem %s1, %s122
      %s124 = smul.u32 8, %s12
      %v125 = vld [vmem:[%s116] sm:$0xff]
      %v126 = vld [vmem:[%s116 + $0x10] sm:$0xff]
      %v127 = vld [vmem:[%s116 + $0x20] sm:$0xff]
      %v128 = vld [vmem:[%s116 + $0x30] sm:$0xff]
      %v129 = vld [vmem:[%s116 + $0x40] sm:$0xff]
      %v130 = vld [vmem:[%s116 + $0x50] sm:$0xff]
      %v131 = vld [vmem:[%s116 + $0x60] sm:$0xff]
      %v132 = vld [vmem:[%s116 + $0x70] sm:$0xff]
      %v133 = vld [vmem:[%s116 + $0x80] sm:$0xff]
      %v134 = vld [vmem:[%s116 + $0x90] sm:$0xff]
      %v135 = vld [vmem:[%s116 + $0xa0] sm:$0xff]
      %v136 = vld [vmem:[%s116 + $0xb0] sm:$0xff]
      %v137 = vld [vmem:[%s116 + $0xc0] sm:$0xff]
      %v138 = vld [vmem:[%s116 + $0xd0] sm:$0xff]
      %v139 = vld [vmem:[%s116 + $0xe0] sm:$0xff]
      %v140 = vld [vmem:[%s116 + $0xf0] sm:$0xff]
      %v141 = vld [vmem:[%s116 + $0x100] sm:$0xff]
      %v142 = vld [vmem:[%s116 + $0x110] sm:$0xff]
      %v143 = vld [vmem:[%s116 + $0x120] sm:$0xff]
      %v144 = vld [vmem:[%s116 + $0x130] sm:$0xff]
      %v145 = vld [vmem:[%s116 + $0x140] sm:$0xff]
      %v146 = vld [vmem:[%s116 + $0x150] sm:$0xff]
      %v147 = vld [vmem:[%s116 + $0x160] sm:$0xff]
      %v148 = vld [vmem:[%s116 + $0x170] sm:$0xff]
      %173 = vrot.lane.b32.xlu0 %v125, 120
      %v174 = vpop.permute.xlu0 %173
      %175 = vrot.lane.b32.xlu0 %v126, 120
      %v176 = vpop.permute.xlu0 %175
      %177 = vrot.lane.b32.xlu0 %v127, 120
      %v178 = vpop.permute.xlu0 %177
      %179 = vrot.lane.b32.xlu0 %v128, 120
      %v180 = vpop.permute.xlu0 %179
      %181 = vrot.lane.b32.xlu0 %v129, 120
      %v182 = vpop.permute.xlu0 %181
      %183 = vrot.lane.b32.xlu0 %v130, 120
      %v184 = vpop.permute.xlu0 %183
      %185 = vrot.lane.b32.xlu0 %v131, 120
      %v186 = vpop.permute.xlu0 %185
      %187 = vrot.lane.b32.xlu0 %v132, 120
      %v188 = vpop.permute.xlu0 %187
      %189 = vrot.lane.b32.xlu0 %v133, 120
      %v190 = vpop.permute.xlu0 %189
      %191 = vrot.lane.b32.xlu0 %v134, 120
      %v192 = vpop.permute.xlu0 %191
      %193 = vrot.lane.b32.xlu0 %v135, 120
      %v194 = vpop.permute.xlu0 %193
      %195 = vrot.lane.b32.xlu0 %v136, 120
      %v196 = vpop.permute.xlu0 %195
      %197 = vrot.lane.b32.xlu0 %v137, 120
      %v198 = vpop.permute.xlu0 %197
      %199 = vrot.lane.b32.xlu0 %v138, 120
      %v200 = vpop.permute.xlu0 %199
      %201 = vrot.lane.b32.xlu0 %v139, 120
      %v202 = vpop.permute.xlu0 %201
      %203 = vrot.lane.b32.xlu0 %v140, 120
      %v204 = vpop.permute.xlu0 %203
      %205 = vrot.lane.b32.xlu0 %v141, 120
      %v206 = vpop.permute.xlu0 %205
      %207 = vrot.lane.b32.xlu0 %v142, 120
      %v208 = vpop.permute.xlu0 %207
      %209 = vrot.lane.b32.xlu0 %v143, 120
      %v210 = vpop.permute.xlu0 %209
      %211 = vrot.lane.b32.xlu0 %v144, 120
      %v212 = vpop.permute.xlu0 %211
      %213 = vrot.lane.b32.xlu0 %v145, 120
      %v214 = vpop.permute.xlu0 %213
      %215 = vrot.lane.b32.xlu0 %v146, 120
      %v216 = vpop.permute.xlu0 %215
      %217 = vrot.lane.b32.xlu0 %v147, 120
      %v218 = vpop.permute.xlu0 %217
      %219 = vrot.lane.b32.xlu0 %v148, 120
      %v220 = vpop.permute.xlu0 %219
      %v245 = vadd.f32 %v125, %v174
      %v246 = vadd.f32 %v126, %v176
      %v247 = vadd.f32 %v127, %v178
      %v248 = vadd.f32 %v128, %v180
      %v249 = vadd.f32 %v129, %v182
      %v250 = vadd.f32 %v130, %v184
      %v251 = vadd.f32 %v131, %v186
      %v252 = vadd.f32 %v132, %v188
      %v253 = vadd.f32 %v133, %v190
      %v254 = vadd.f32 %v134, %v192
      %v255 = vadd.f32 %v135, %v194
      %v256 = vadd.f32 %v136, %v196
      %v257 = vadd.f32 %v137, %v198
      %v258 = vadd.f32 %v138, %v200
      %v259 = vadd.f32 %v139, %v202
      %v260 = vadd.f32 %v140, %v204
      %v261 = vadd.f32 %v141, %v206
      %v262 = vadd.f32 %v142, %v208
      %v263 = vadd.f32 %v143, %v210
      %v264 = vadd.f32 %v144, %v212
      %v265 = vadd.f32 %v145, %v214
      %v266 = vadd.f32 %v146, %v216
      %v267 = vadd.f32 %v147, %v218
      %v268 = vadd.f32 %v148, %v220
      %v269 = vld [vmem:[%s116 + $0x8] sm:$0xff]
      %v270 = vld [vmem:[%s116 + $0x18] sm:$0xff]
      %v271 = vld [vmem:[%s116 + $0x28] sm:$0xff]
      %v272 = vld [vmem:[%s116 + $0x38] sm:$0xff]
      %v273 = vld [vmem:[%s116 + $0x48] sm:$0xff]
      %v274 = vld [vmem:[%s116 + $0x58] sm:$0xff]
      %v275 = vld [vmem:[%s116 + $0x68] sm:$0xff]
      %v276 = vld [vmem:[%s116 + $0x78] sm:$0xff]
      %v277 = vld [vmem:[%s116 + $0x88] sm:$0xff]
      %v278 = vld [vmem:[%s116 + $0x98] sm:$0xff]
      %v279 = vld [vmem:[%s116 + $0xa8] sm:$0xff]
      %v280 = vld [vmem:[%s116 + $0xb8] sm:$0xff]
      %v281 = vld [vmem:[%s116 + $0xc8] sm:$0xff]
      %v282 = vld [vmem:[%s116 + $0xd8] sm:$0xff]
      %v283 = vld [vmem:[%s116 + $0xe8] sm:$0xff]
      %v284 = vld [vmem:[%s116 + $0xf8] sm:$0xff]
      %v285 = vld [vmem:[%s116 + $0x108] sm:$0xff]
      %v286 = vld [vmem:[%s116 + $0x118] sm:$0xff]
      %v287 = vld [vmem:[%s116 + $0x128] sm:$0xff]
      %v288 = vld [vmem:[%s116 + $0x138] sm:$0xff]
      %v289 = vld [vmem:[%s116 + $0x148] sm:$0xff]
      %v290 = vld [vmem:[%s116 + $0x158] sm:$0xff]
      %v291 = vld [vmem:[%s116 + $0x168] sm:$0xff]
      %v292 = vld [vmem:[%s116 + $0x178] sm:$0xff]
      %v293 = vadd.f32 %v245, %v269
      %v294 = vadd.f32 %v246, %v270
      %v295 = vadd.f32 %v247, %v271
      %v296 = vadd.f32 %v248, %v272
      %v297 = vadd.f32 %v249, %v273
      %v298 = vadd.f32 %v250, %v274
      %v299 = vadd.f32 %v251, %v275
      %v300 = vadd.f32 %v252, %v276
      %v301 = vadd.f32 %v253, %v277
      %v302 = vadd.f32 %v254, %v278
      %v303 = vadd.f32 %v255, %v279
      %v304 = vadd.f32 %v256, %v280
      %v305 = vadd.f32 %v257, %v281
      %v306 = vadd.f32 %v258, %v282
      %v307 = vadd.f32 %v259, %v283
      %v308 = vadd.f32 %v260, %v284
      %v309 = vadd.f32 %v261, %v285
      %v310 = vadd.f32 %v262, %v286
      %v311 = vadd.f32 %v263, %v287
      %v312 = vadd.f32 %v264, %v288
      %v313 = vadd.f32 %v265, %v289
      %v314 = vadd.f32 %v266, %v290
      %v315 = vadd.f32 %v267, %v291
      %v316 = vadd.f32 %v268, %v292
      %341 = vrot.lane.b32.xlu0 %v269, 120
      %v342 = vpop.permute.xlu0 %341
      %343 = vrot.lane.b32.xlu0 %v270, 120
      %v344 = vpop.permute.xlu0 %343
      %345 = vrot.lane.b32.xlu0 %v271, 120
      %v346 = vpop.permute.xlu0 %345
      %347 = vrot.lane.b32.xlu0 %v272, 120
      %v348 = vpop.permute.xlu0 %347
      %349 = vrot.lane.b32.xlu0 %v273, 120
      %v350 = vpop.permute.xlu0 %349
      %351 = vrot.lane.b32.xlu0 %v274, 120
      %v352 = vpop.permute.xlu0 %351
      %353 = vrot.lane.b32.xlu0 %v275, 120
      %v354 = vpop.permute.xlu0 %353
      %355 = vrot.lane.b32.xlu0 %v276, 120
      %v356 = vpop.permute.xlu0 %355
      %357 = vrot.lane.b32.xlu0 %v277, 120
      %v358 = vpop.permute.xlu0 %357
      %359 = vrot.lane.b32.xlu0 %v278, 120
      %v360 = vpop.permute.xlu0 %359
      %361 = vrot.lane.b32.xlu0 %v279, 120
      %v362 = vpop.permute.xlu0 %361
      %363 = vrot.lane.b32.xlu0 %v280, 120
      %v364 = vpop.permute.xlu0 %363
      %365 = vrot.lane.b32.xlu0 %v281, 120
      %v366 = vpop.permute.xlu0 %365
      %367 = vrot.lane.b32.xlu0 %v282, 120
      %v368 = vpop.permute.xlu0 %367
      %369 = vrot.lane.b32.xlu0 %v283, 120
      %v370 = vpop.permute.xlu0 %369
      %371 = vrot.lane.b32.xlu0 %v284, 120
      %v372 = vpop.permute.xlu0 %371
      %373 = vrot.lane.b32.xlu0 %v285, 120
      %v374 = vpop.permute.xlu0 %373
      %375 = vrot.lane.b32.xlu0 %v286, 120
      %v376 = vpop.permute.xlu0 %375
      %377 = vrot.lane.b32.xlu0 %v287, 120
      %v378 = vpop.permute.xlu0 %377
      %379 = vrot.lane.b32.xlu0 %v288, 120
      %v380 = vpop.permute.xlu0 %379
      %381 = vrot.lane.b32.xlu0 %v289, 120
      %v382 = vpop.permute.xlu0 %381
      %383 = vrot.lane.b32.xlu0 %v290, 120
      %v384 = vpop.permute.xlu0 %383
      %385 = vrot.lane.b32.xlu0 %v291, 120
      %v386 = vpop.permute.xlu0 %385
      %387 = vrot.lane.b32.xlu0 %v292, 120
      %v388 = vpop.permute.xlu0 %387
      %v413 = vadd.f32 %v293, %v342
      %v414 = vadd.f32 %v294, %v344
      %v415 = vadd.f32 %v295, %v346
      %v416 = vadd.f32 %v296, %v348
      %v417 = vadd.f32 %v297, %v350
      %v418 = vadd.f32 %v298, %v352
      %v419 = vadd.f32 %v299, %v354
      %v420 = vadd.f32 %v300, %v356
      %v421 = vadd.f32 %v301, %v358
      %v422 = vadd.f32 %v302, %v360
      %v423 = vadd.f32 %v303, %v362
      %v424 = vadd.f32 %v304, %v364
      %v425 = vadd.f32 %v305, %v366
      %v426 = vadd.f32 %v306, %v368
      %v427 = vadd.f32 %v307, %v370
      %v428 = vadd.f32 %v308, %v372
      %v429 = vadd.f32 %v309, %v374
      %v430 = vadd.f32 %v310, %v376
      %v431 = vadd.f32 %v311, %v378
      %v432 = vadd.f32 %v312, %v380
      %v433 = vadd.f32 %v313, %v382
      %v434 = vadd.f32 %v314, %v384
      %v435 = vadd.f32 %v315, %v386
      %v436 = vadd.f32 %v316, %v388
      %v437 = vmul.f32 %v413, 0.25
      %v438 = vmul.f32 %v414, 0.25
      %v439 = vmul.f32 %v415, 0.25
      %v440 = vmul.f32 %v416, 0.25
      %v441 = vmul.f32 %v417, 0.25
      %v442 = vmul.f32 %v418, 0.25
      %v443 = vmul.f32 %v419, 0.25
      %v444 = vmul.f32 %v420, 0.25
      %v445 = vmul.f32 %v421, 0.25
      %v446 = vmul.f32 %v422, 0.25
      %v447 = vmul.f32 %v423, 0.25
      %v448 = vmul.f32 %v424, 0.25
      %v449 = vmul.f32 %v425, 0.25
      %v450 = vmul.f32 %v426, 0.25
      %v451 = vmul.f32 %v427, 0.25
      %v452 = vmul.f32 %v428, 0.25
      %v453 = vmul.f32 %v429, 0.25
      %v454 = vmul.f32 %v430, 0.25
      %v455 = vmul.f32 %v431, 0.25
      %v456 = vmul.f32 %v432, 0.25
      %v457 = vmul.f32 %v433, 0.25
      %v458 = vmul.f32 %v434, 0.25
      %v459 = vmul.f32 %v435, 0.25
      %v460 = vmul.f32 %v436, 0.25
      %vm461 = vcmask 64512
      %462 = vst.msk [vmem:[%s123] sm:$0xff] %vm461, %v437
      %463 = vst.msk [vmem:[%s123 + $0x8] sm:$0xff] %vm461, %v438
      %464 = vst.msk [vmem:[%s123 + $0x10] sm:$0xff] %vm461, %v439
      %465 = vst.msk [vmem:[%s123 + $0x18] sm:$0xff] %vm461, %v440
      %466 = vst.msk [vmem:[%s123 + $0x20] sm:$0xff] %vm461, %v441
      %467 = vst.msk [vmem:[%s123 + $0x28] sm:$0xff] %vm461, %v442
      %468 = vst.msk [vmem:[%s123 + $0x30] sm:$0xff] %vm461, %v443
      %469 = vst.msk [vmem:[%s123 + $0x38] sm:$0xff] %vm461, %v444
      %470 = vst.msk [vmem:[%s123 + $0x40] sm:$0xff] %vm461, %v445
      %471 = vst.msk [vmem:[%s123 + $0x48] sm:$0xff] %vm461, %v446
      %472 = vst.msk [vmem:[%s123 + $0x50] sm:$0xff] %vm461, %v447
      %473 = vst.msk [vmem:[%s123 + $0x58] sm:$0xff] %vm461, %v448
      %474 = vst.msk [vmem:[%s123 + $0x60] sm:$0xff] %vm461, %v449
      %475 = vst.msk [vmem:[%s123 + $0x68] sm:$0xff] %vm461, %v450
      %476 = vst.msk [vmem:[%s123 + $0x70] sm:$0xff] %vm461, %v451
      %477 = vst.msk [vmem:[%s123 + $0x78] sm:$0xff] %vm461, %v452
      %478 = vst.msk [vmem:[%s123 + $0x80] sm:$0xff] %vm461, %v453
      %479 = vst.msk [vmem:[%s123 + $0x88] sm:$0xff] %vm461, %v454
      %480 = vst.msk [vmem:[%s123 + $0x90] sm:$0xff] %vm461, %v455
      %481 = vst.msk [vmem:[%s123 + $0x98] sm:$0xff] %vm461, %v456
      %482 = vst.msk [vmem:[%s123 + $0xa0] sm:$0xff] %vm461, %v457
      %483 = vst.msk [vmem:[%s123 + $0xa8] sm:$0xff] %vm461, %v458
      %484 = vst.msk [vmem:[%s123 + $0xb0] sm:$0xff] %vm461, %v459
      %485 = vst.msk [vmem:[%s123 + $0xb8] sm:$0xff] %vm461, %v460
      %s486 = smul.u32 8, %s12
      %p487 = scmp.lt.s32.totalorder %s486, 31
      %s488 = scalar_select %p487, %s486, 31
      %s489 = smul.addr %s488, 3
      %s490 = smul.addr %s489, 8
      %s491 = scalar_lea.vmem %s1, %s490
      // Predicated region
      $region25: #{tpu_custom_call.1} parent=23 // pred_check
        %p492 = pneg %p56
      $region26: #{tpu_custom_call.1} parent=23 // pred_check_branch
        %494 = sbr.rel (%p492) target = $region28
      $region27: #{tpu_custom_call.1} parent=23 // pred_region
        %s495 = smul.u32 8, %s12
      $region28: #{tpu_custom_call.1} parent=23 // pred_fallthru
        _
    $region24: #{tpu_custom_call.1} parent=5 // pred_fallthru
      _
    %p496 = scmp.le.s32.totalorder 2, %s7
    // Predicated region
    $region29: #{tpu_custom_call.1} parent=5 // pred_check
      %p497 = pneg %p496
    $region30: #{tpu_custom_call.1} parent=5 // pred_check_branch
      %499 = sbr.rel (%p497) target = $region32
    $region31: #{tpu_custom_call.1} parent=5 // pred_region
      %s500 = ssub.s32 %s7, 2
      // Predicated region
      $region33: #{tpu_custom_call.1} parent=31 // pred_check
        %p501 = pneg %p62
      $region34: #{tpu_custom_call.1} parent=31 // pred_check_branch
        %503 = sbr.rel (%p501) target = $region36
      $region35: #{tpu_custom_call.1} parent=31 // pred_region
        %s504 = smul.u32 8, %s13
        %p505 = scmp.lt.s32.totalorder %s504, 31
        %s506 = scalar_select %p505, %s504, 31
        %s507 = smul.addr %s506, 3
        %s508 = smul.addr %s507, 8
        %s509 = scalar_lea.vmem %s1, %s508
      $region36: #{tpu_custom_call.1} parent=31 // pred_fallthru
        _
    $region32: #{tpu_custom_call.1} parent=5 // pred_fallthru
      _
  $region6: #{tpu_custom_call.1} parent=0 // loop_footer
    %s11 = sadd.s32 1, %s7
  $region7: #{tpu_custom_call.1} parent=0 // loop_footer_branch
    %6 = sbr.rel target = $region3
  $region8: #{tpu_custom_call.1} parent=0 // loop_exit
    _

</llo_original>
